<compile_context>
chip_gen: v5e
topology: v5e:2x2
jax: 0.10.0
libtpu: 0.0.40
codegen_flags: <defaults>
</compile_context>

<pallas_src>
import functools

import jax
import jax.numpy as jnp
from jax.experimental import pallas as pl
from jax.experimental.pallas import tpu as pltpu


def _fused_gc_kernel(xv_ref, adjv_ref, wv_ref, bv_ref,
                     xe_ref, adje_ref, we_ref, be_ref,
                     ov_ref, oe_ref, *, use_activ):
    """Single step: node conv and edge conv, both lane-packed over G slices.

    xv: (N, G*Cv_in)   adj_v: (N, N)   wv: (G*Cv_in, G*Cv_out)  bv: (1, G*Cv_out)
    xe: (E, G*Ce_in)   adj_e: (E, E)   we: (G*Ce_in, G*Ce_out)  be: (1, G*Ce_out)
    """
    # ---- node graph-conv:  relu( adj_v @ (X @ Wv') + bv' ) -----------------
    tv = jnp.dot(xv_ref[...], wv_ref[...], preferred_element_type=jnp.float32)
    yv = jnp.dot(adjv_ref[...], tv, preferred_element_type=jnp.float32)
    yv = yv + bv_ref[...]
    if use_activ:
        yv = jnp.maximum(yv, 0.0)
    ov_ref[...] = yv.astype(ov_ref.dtype)

    # ---- edge graph-conv:  relu( adj_e @ (relu(Z) @ We') + be' ) ------------
    xe = xe_ref[...]
    if use_activ:
        xe = jnp.maximum(xe, 0.0)          # ReLU applied between the two convs
    te = jnp.dot(xe, we_ref[...], preferred_element_type=jnp.float32)
    ye = jnp.dot(adje_ref[...], te, preferred_element_type=jnp.float32)
    ye = ye + be_ref[...]
    if use_activ:
        ye = jnp.maximum(ye, 0.0)
    oe_ref[...] = ye.astype(oe_ref.dtype)


def _fused_call(Xp, adj_v, wv_blk, bv_t, Zp, adj_e, we_blk, be_t, *, use_activ):
    N, _ = Xp.shape
    E, _ = Zp.shape
    GCv_out = wv_blk.shape[1]
    GCe_out = we_blk.shape[1]

    def full2d(shape):
        # Block = entire (small) array; resident in VMEM for the single grid step.
        return pl.BlockSpec(shape, lambda i: (0, 0))

    kernel = functools.partial(_fused_gc_kernel, use_activ=use_activ)
    return pl.pallas_call(
        kernel,
        out_shape=(jax.ShapeDtypeStruct((N, GCv_out), Xp.dtype),
                   jax.ShapeDtypeStruct((E, GCe_out), Zp.dtype)),
        grid=(1,),
        in_specs=[full2d(Xp.shape), full2d(adj_v.shape),
                  full2d(wv_blk.shape), full2d(bv_t.shape),
                  full2d(Zp.shape), full2d(adj_e.shape),
                  full2d(we_blk.shape), full2d(be_t.shape)],
        out_specs=(full2d((N, GCv_out)), full2d((E, GCe_out))),
        compiler_params=pltpu.CompilerParams(dimension_semantics=("arbitrary",)),
    )(Xp, adj_v, wv_blk, bv_t, Zp, adj_e, we_blk, be_t)


def gc_node_edge_module(X, Z, adj_e, adj_v, params, *, use_norm=True, use_activ=True):
    """Eval-mode forward of GCNodeEdgeModule (T / weight_sec unused by the forward)."""
    B, F, N, Cv_in = X.shape
    _, _, E, Ce_in = Z.shape
    G = B * F
    w_v, b_v = params["w_v"], params["b_v"]
    w_e, b_e = params["w_e"], params["b_e"]
    Cv_out, Ce_out = w_v.shape[1], w_e.shape[1]

    # Fold eval-mode BatchNorm (running stats) into a per-output-channel affine and
    # then into the conv weight/bias:  BN(A @ (X@W) + b) = A @ (X @ (W*s)) + (b*s + t).
    if use_norm:
        sv, tv = params["bn1_scale"], params["bn1_shift"]
        se, te = params["bn2_scale"], params["bn2_shift"]
    else:
        sv = jnp.ones((Cv_out,), X.dtype); tv = jnp.zeros((Cv_out,), X.dtype)
        se = jnp.ones((Ce_out,), Z.dtype); te = jnp.zeros((Ce_out,), Z.dtype)
    wv_f = w_v * sv[None, :]
    bv_f = b_v * sv + tv
    we_f = w_e * se[None, :]
    be_f = b_e * se + te

    # Lane-pack the G = B*F independent graph slices along the channel (lane) dim:
    #   (B,F,N,C) -> (N, G*C).  The shared per-slice weight becomes a block-diagonal
    #   (G*Cin, G*Cout) matrix so the whole batch is one pair of lane-dense matmuls.
    Xp = jnp.transpose(X, (2, 0, 1, 3)).reshape(N, G * Cv_in)
    Zp = jnp.transpose(Z, (2, 0, 1, 3)).reshape(E, G * Ce_in)
    eye = jnp.eye(G, dtype=X.dtype)
    wv_blk = jnp.kron(eye, wv_f)                 # (G*Cv_in, G*Cv_out)
    we_blk = jnp.kron(eye, we_f)                 # (G*Ce_in, G*Ce_out)
    bv_t = jnp.tile(bv_f, (G,))[None, :]         # (1, G*Cv_out)
    be_t = jnp.tile(be_f, (G,))[None, :]         # (1, G*Ce_out)

    ov, oe = _fused_call(Xp, adj_v, wv_blk, bv_t, Zp, adj_e, we_blk, be_t,
                         use_activ=use_activ)

    Xo = ov.reshape(N, B, F, Cv_out).transpose(1, 2, 0, 3)
    Zo = oe.reshape(E, B, F, Ce_out).transpose(1, 2, 0, 3)
    return Xo, Zo


def _reference(X, Z, adj_e, adj_v, params, *, use_norm=True, use_activ=True):
    """Pure-JAX reference mirroring the PyTorch module (eval mode)."""
    Xh = jnp.einsum('nm,bfmc->bfnc', adj_v,
                    jnp.einsum('bfnc,cd->bfnd', X, params["w_v"])) + params["b_v"]
    if use_norm:
        Xh = Xh * params["bn1_scale"] + params["bn1_shift"]
    Zr = Z
    if use_activ:
        Xh = jnp.maximum(Xh, 0.0)
        Zr = jnp.maximum(Z, 0.0)
    Zh = jnp.einsum('em,bfmc->bfec', adj_e,
                    jnp.einsum('bfec,cd->bfed', Zr, params["w_e"])) + params["b_e"]
    if use_norm:
        Zh = Zh * params["bn2_scale"] + params["bn2_shift"]
    if use_activ:
        Xh = jnp.maximum(Xh, 0.0)   # no-op: relu(relu(x)) == relu(x)
        Zh = jnp.maximum(Zh, 0.0)
    return Xh, Zh


def _kaiming_uniform(key, shape):
    # PyTorch kaiming_uniform_(nonlinearity='relu'): bound = sqrt(2)*sqrt(3/fan_in),
    # with fan_in = shape[1] for a 2-D parameter.
    fan_in = shape[1]
    bound = (2.0 ** 0.5) * (3.0 / fan_in) ** 0.5
    return jax.random.uniform(key, shape, jnp.float32, -bound, bound)


if __name__ == "__main__":
    key = jax.random.PRNGKey(0)
    ks = jax.random.split(key, 6)

    # Small shapes consistent with the module.
    B, FR = 2, 4            # batch, in_frames
    N, E = 16, 24           # nodes, edges
    nfeat_v, nfeat_e = 32, 16
    nhid_v, nhid_e = 32, 32

    X = jax.random.normal(ks[0], (B, FR, N, nfeat_v), jnp.float32)
    Z = jax.random.normal(ks[1], (B, FR, E, nfeat_e), jnp.float32)
    adj_v = jax.random.normal(ks[2], (N, N), jnp.float32)
    adj_e = jax.random.normal(ks[3], (E, E), jnp.float32)

    eps = 1e-5
    params = {
        # NodeEdgeConv(node_layer=True): weight [nfeat_v, nhid_v], bias zeros
        "w_v": _kaiming_uniform(ks[4], (nfeat_v, nhid_v)),
        "b_v": jnp.zeros((nhid_v,), jnp.float32),
        # NodeEdgeConv(node_layer=False): weight [nfeat_e, nhid_e], bias zeros
        "w_e": _kaiming_uniform(ks[5], (nfeat_e, nhid_e)),
        "b_e": jnp.zeros((nhid_e,), jnp.float32),
        # BatchNorm2d eval-mode affine at default init (mean=0, var=1, gamma=1, beta=0)
        "bn1_scale": jnp.full((nhid_v,), 1.0 / (1.0 + eps) ** 0.5, jnp.float32),
        "bn1_shift": jnp.zeros((nhid_v,), jnp.float32),
        "bn2_scale": jnp.full((nhid_e,), 1.0 / (1.0 + eps) ** 0.5, jnp.float32),
        "bn2_shift": jnp.zeros((nhid_e,), jnp.float32),
    }

    Xo, Zo = jax.jit(gc_node_edge_module)(X, Z, adj_e, adj_v, params)
    jax.block_until_ready((Xo, Zo))
    assert Xo.shape == (B, FR, N, nhid_v) and Zo.shape == (B, FR, E, nhid_e)

    # Sanity check against a pure-JAX reference (loose tol: MXU f32 matmul passes).
    Xr, Zr = _reference(X, Z, adj_e, adj_v, params)
    assert bool(jnp.allclose(Xo, Xr, rtol=2e-2, atol=2e-2)), \
        f"X mismatch, max abs err {float(jnp.max(jnp.abs(Xo - Xr)))}"
    assert bool(jnp.allclose(Zo, Zr, rtol=2e-2, atol=2e-2)), \
        f"Z mismatch, max abs err {float(jnp.max(jnp.abs(Zo - Zr)))}"
    print("KERNEL_OK")
</pallas_src>

<mosaic_0001>
module attributes {stable_mosaic.version = 11 : i64} {
  func.func @_fused_gc_kernel(%arg0: i32, %arg1: memref<16x256xf32, #tpu.memory_space<vmem>>, %arg2: memref<16x16xf32, #tpu.memory_space<vmem>>, %arg3: memref<256x256xf32, #tpu.memory_space<vmem>>, %arg4: memref<1x256xf32, #tpu.memory_space<vmem>>, %arg5: memref<24x128xf32, #tpu.memory_space<vmem>>, %arg6: memref<24x24xf32, #tpu.memory_space<vmem>>, %arg7: memref<128x256xf32, #tpu.memory_space<vmem>>, %arg8: memref<1x256xf32, #tpu.memory_space<vmem>>, %arg9: memref<16x256xf32, #tpu.memory_space<vmem>>, %arg10: memref<24x256xf32, #tpu.memory_space<vmem>>) attributes {dimension_semantics = [#tpu.dimension_semantics<arbitrary>], iteration_bounds = array<i64: 1>, scalar_prefetch = 0 : i64, scratch_operands = 0 : i64, tpu.core_type = #tpu.core_type<tc>, window_params = [{pipeline_mode = #tpu.pipeline_mode<synchronous>, transform_indices = @transform_0, window_bounds = array<i64: 16, 256>}, {pipeline_mode = #tpu.pipeline_mode<synchronous>, transform_indices = @transform_1, window_bounds = array<i64: 16, 16>}, {pipeline_mode = #tpu.pipeline_mode<synchronous>, transform_indices = @transform_2, window_bounds = array<i64: 256, 256>}, {pipeline_mode = #tpu.pipeline_mode<synchronous>, transform_indices = @transform_3, window_bounds = array<i64: 1, 256>}, {pipeline_mode = #tpu.pipeline_mode<synchronous>, transform_indices = @transform_4, window_bounds = array<i64: 24, 128>}, {pipeline_mode = #tpu.pipeline_mode<synchronous>, transform_indices = @transform_5, window_bounds = array<i64: 24, 24>}, {pipeline_mode = #tpu.pipeline_mode<synchronous>, transform_indices = @transform_6, window_bounds = array<i64: 128, 256>}, {pipeline_mode = #tpu.pipeline_mode<synchronous>, transform_indices = @transform_7, window_bounds = array<i64: 1, 256>}, {pipeline_mode = #tpu.pipeline_mode<synchronous>, transform_indices = @transform_8, window_bounds = array<i64: 16, 256>}, {pipeline_mode = #tpu.pipeline_mode<synchronous>, transform_indices = @transform_9, window_bounds = array<i64: 24, 256>}]} {
    %c0 = arith.constant 0 : index
    %c0_0 = arith.constant 0 : index
    %0 = vector.load %arg1[%c0, %c0_0] : memref<16x256xf32, #tpu.memory_space<vmem>>, vector<16x256xf32>
    %c0_1 = arith.constant 0 : index
    %c0_2 = arith.constant 0 : index
    %1 = vector.load %arg3[%c0_1, %c0_2] : memref<256x256xf32, #tpu.memory_space<vmem>>, vector<256x256xf32>
    %cst = arith.constant dense<0.000000e+00> : vector<16x256xf32>
    %2 = tpu.matmul %0, %1, %cst {dimension_numbers = #tpu.dot_dimension_numbers<[1], [0], [0], [1], [0, 0, 1, 1], [], []>} : vector<16x256xf32>, vector<256x256xf32>, vector<16x256xf32> -> vector<16x256xf32>
    %c0_3 = arith.constant 0 : index
    %c0_4 = arith.constant 0 : index
    %3 = vector.load %arg2[%c0_3, %c0_4] : memref<16x16xf32, #tpu.memory_space<vmem>>, vector<16x16xf32>
    %cst_5 = arith.constant dense<0.000000e+00> : vector<16x256xf32>
    %4 = tpu.matmul %3, %2, %cst_5 {dimension_numbers = #tpu.dot_dimension_numbers<[1], [0], [0], [1], [0, 0, 1, 1], [], []>} : vector<16x16xf32>, vector<16x256xf32>, vector<16x256xf32> -> vector<16x256xf32>
    %c0_6 = arith.constant 0 : index
    %c0_7 = arith.constant 0 : index
    %5 = vector.load %arg4[%c0_6, %c0_7] : memref<1x256xf32, #tpu.memory_space<vmem>>, vector<1x256xf32>
    %6 = vector.broadcast %5 : vector<1x256xf32> to vector<16x256xf32>
    %7 = arith.addf %4, %6 : vector<16x256xf32>
    %cst_8 = arith.constant 0.000000e+00 : f32
    %8 = vector.broadcast %cst_8 : f32 to vector<16x256xf32>
    %9 = arith.maximumf %7, %8 : vector<16x256xf32>
    %c0_9 = arith.constant 0 : index
    %c0_10 = arith.constant 0 : index
    %10 = vector.load %arg9[%c0_9, %c0_10] : memref<16x256xf32, #tpu.memory_space<vmem>>, vector<16x256xf32>
    tpu.vector_store %arg9[%c0_9, %c0_10], %9 {strides = array<i32>} : memref<16x256xf32, #tpu.memory_space<vmem>>, vector<16x256xf32>,
    %c0_11 = arith.constant 0 : index
    %c0_12 = arith.constant 0 : index
    %11 = vector.load %arg5[%c0_11, %c0_12] : memref<24x128xf32, #tpu.memory_space<vmem>>, vector<24x128xf32>
    %cst_13 = arith.constant 0.000000e+00 : f32
    %12 = vector.broadcast %cst_13 : f32 to vector<24x128xf32>
    %13 = arith.maximumf %11, %12 : vector<24x128xf32>
    %c0_14 = arith.constant 0 : index
    %c0_15 = arith.constant 0 : index
    %14 = vector.load %arg7[%c0_14, %c0_15] : memref<128x256xf32, #tpu.memory_space<vmem>>, vector<128x256xf32>
    %cst_16 = arith.constant dense<0.000000e+00> : vector<24x256xf32>
    %15 = tpu.matmul %13, %14, %cst_16 {dimension_numbers = #tpu.dot_dimension_numbers<[1], [0], [0], [1], [0, 0, 1, 1], [], []>} : vector<24x128xf32>, vector<128x256xf32>, vector<24x256xf32> -> vector<24x256xf32>
    %c0_17 = arith.constant 0 : index
    %c0_18 = arith.constant 0 : index
    %16 = vector.load %arg6[%c0_17, %c0_18] : memref<24x24xf32, #tpu.memory_space<vmem>>, vector<24x24xf32>
    %cst_19 = arith.constant dense<0.000000e+00> : vector<24x256xf32>
    %17 = tpu.matmul %16, %15, %cst_19 {dimension_numbers = #tpu.dot_dimension_numbers<[1], [0], [0], [1], [0, 0, 1, 1], [], []>} : vector<24x24xf32>, vector<24x256xf32>, vector<24x256xf32> -> vector<24x256xf32>
    %c0_20 = arith.constant 0 : index
    %c0_21 = arith.constant 0 : index
    %18 = vector.load %arg8[%c0_20, %c0_21] : memref<1x256xf32, #tpu.memory_space<vmem>>, vector<1x256xf32>
    %19 = vector.broadcast %18 : vector<1x256xf32> to vector<24x256xf32>
    %20 = arith.addf %17, %19 : vector<24x256xf32>
    %cst_22 = arith.constant 0.000000e+00 : f32
    %21 = vector.broadcast %cst_22 : f32 to vector<24x256xf32>
    %22 = arith.maximumf %20, %21 : vector<24x256xf32>
    %c0_23 = arith.constant 0 : index
    %c0_24 = arith.constant 0 : index
    %23 = vector.load %arg10[%c0_23, %c0_24] : memref<24x256xf32, #tpu.memory_space<vmem>>, vector<24x256xf32>
    tpu.vector_store %arg10[%c0_23, %c0_24], %22 {strides = array<i32>} : memref<24x256xf32, #tpu.memory_space<vmem>>, vector<24x256xf32>,
    return
  }
  func.func @transform_0(%arg0: i32) -> (i32, i32) {
    %c0_i32 = arith.constant 0 : i32
    %c0_i32_0 = arith.constant 0 : i32
    %c0_i32_1 = arith.constant 0 : i32
    return %c0_i32, %c0_i32_0 : i32, i32
  }
  func.func @transform_1(%arg0: i32) -> (i32, i32) {
    %c0_i32 = arith.constant 0 : i32
    %c0_i32_0 = arith.constant 0 : i32
    %c0_i32_1 = arith.constant 0 : i32
    return %c0_i32, %c0_i32_0 : i32, i32
  }
  func.func @transform_2(%arg0: i32) -> (i32, i32) {
    %c0_i32 = arith.constant 0 : i32
    %c0_i32_0 = arith.constant 0 : i32
    %c0_i32_1 = arith.constant 0 : i32
    return %c0_i32, %c0_i32_0 : i32, i32
  }
  func.func @transform_3(%arg0: i32) -> (i32, i32) {
    %c0_i32 = arith.constant 0 : i32
    %c0_i32_0 = arith.constant 0 : i32
    %c0_i32_1 = arith.constant 0 : i32
    return %c0_i32, %c0_i32_0 : i32, i32
  }
  func.func @transform_4(%arg0: i32) -> (i32, i32) {
    %c0_i32 = arith.constant 0 : i32
    %c0_i32_0 = arith.constant 0 : i32
    %c0_i32_1 = arith.constant 0 : i32
    return %c0_i32, %c0_i32_0 : i32, i32
  }
  func.func @transform_5(%arg0: i32) -> (i32, i32) {
    %c0_i32 = arith.constant 0 : i32
    %c0_i32_0 = arith.constant 0 : i32
    %c0_i32_1 = arith.constant 0 : i32
    return %c0_i32, %c0_i32_0 : i32, i32
  }
  func.func @transform_6(%arg0: i32) -> (i32, i32) {
    %c0_i32 = arith.constant 0 : i32
    %c0_i32_0 = arith.constant 0 : i32
    %c0_i32_1 = arith.constant 0 : i32
    return %c0_i32, %c0_i32_0 : i32, i32
  }
  func.func @transform_7(%arg0: i32) -> (i32, i32) {
    %c0_i32 = arith.constant 0 : i32
    %c0_i32_0 = arith.constant 0 : i32
    %c0_i32_1 = arith.constant 0 : i32
    return %c0_i32, %c0_i32_0 : i32, i32
  }
  func.func @transform_8(%arg0: i32) -> (i32, i32) {
    %c0_i32 = arith.constant 0 : i32
    %c0_i32_0 = arith.constant 0 : i32
    %c0_i32_1 = arith.constant 0 : i32
    return %c0_i32, %c0_i32_0 : i32, i32
  }
  func.func @transform_9(%arg0: i32) -> (i32, i32) {
    %c0_i32 = arith.constant 0 : i32
    %c0_i32_0 = arith.constant 0 : i32
    %c0_i32_1 = arith.constant 0 : i32
    return %c0_i32, %c0_i32_0 : i32, i32
  }
}

</mosaic_0001>

<llo_original>
// kernel: tile.13
$region0: #{tile.13}
  #allocation0 [shape = 's32[1]{0}', space=sflag, size = 0x4, scoped, tag = 'scoped memory for tile.13']
  %s0 = inlined_call_operand.vmem [shape: f32[32], index: 0, kind: input, shape index: {}]
  %s1 = inlined_call_operand.vmem [shape: f32[8,32], index: 1, kind: output, shape index: {}]
  // Predicated region
  $region2: #{tile.13} parent=0 // pred_check
    _
  $region3: #{tile.13} parent=0 // pred_check_branch
    %3 = sbr.rel (0) target = $region5
  $region4: #{tile.13} parent=0 // pred_region
    _
  $region5: #{tile.13} parent=0 // pred_fallthru
    _
  %v4 = vld [vmem:[%s0] ss:$0 sm:$0xff]
  %5 = vst [vmem:[%s1] sm:$0xff] %v4

// kernel: tile.14
$region0: #{tile.14}
  %s0 = inlined_call_operand.vmem [shape: f32[8,32], index: 0, kind: input, shape index: {}]
  %s1 = inlined_call_operand.vmem [shape: f32[1,256], index: 1, kind: output, shape index: {}]
  $region1: #{tile.14} parent=0
    #allocation0 [shape = 'u8[8192]{0}', space=vmem, size = 0x2000, scoped, tag = 'scoped mem for output reshape']
    %s2 = smov 3
    %v3 = vld [vmem:[%s0] ss:$4 sm:%s2]
    %vm4 = vcmask 261120
    %5 = vst.msk [vmem:[#allocation0] ss:$8 sm:$0x3] %vm4, %v3
    %s6 = scalar_lea.vmem %s0, 3
    %s7 = smov 3
    %v8 = vld [vmem:[%s6] ss:$4 sm:%s7]
    %9 = vrot.lane.b32.xlu0 %v8, 96
    %v10 = vpop.permute.xlu0 %9
    %vm11 = vcmask 1048320
    %12 = vst.msk [vmem:[#allocation0] ss:$8 sm:$0x3] %vm11, %v10
    %s13 = scalar_lea.vmem %s0, 2
    %s14 = smov 3
    %v15 = vld [vmem:[%s13] ss:$4 sm:%s14]
    %16 = vrot.lane.b32.xlu0 %v15, 64
    %v17 = vpop.permute.xlu0 %16
    %vm18 = vcmask 785920
    %19 = vst.msk [vmem:[#allocation0] ss:$8 sm:$0x3] %vm18, %v17
    %s20 = scalar_lea.vmem %s0, 1
    %s21 = smov 3
    %v22 = vld [vmem:[%s20] ss:$4 sm:%s21]
    %23 = vrot.lane.b32.xlu0 %v22, 32
    %v24 = vpop.permute.xlu0 %23
    %vm25 = vcmask 523520
    %26 = vst.msk [vmem:[#allocation0] ss:$8 sm:$0x3] %vm25, %v24
    %s28 = ssub.s32 2, 1
    %v29 = vld [vmem:[#allocation0] sm:%s28]
    %s31 = ssub.s32 2, 1
    %32 = vst [vmem:[%s1] sm:%s31] %v29
    %s33 = scalar_lea.vmem [#allocation0], 8
    %v34 = vld [vmem:[%s33] sm:%s28]
    %s36 = ssub.s32 2, 1
    %s37 = scalar_lea.vmem %s1, 1
    %38 = vst [vmem:[%s37] sm:%s36] %v34

// kernel: gc_node_edge_module.1
$region0: #{gc_node_edge_module.1}
  #allocation0 [shape = 'u32[]', space=smem, size = 0x4, offset = 0x4, fixed_abs, tag = 'smem constant byte address 0x4 - core index']
  #allocation1 [shape = 'u32[72,128]{1,0:T(1,128)}', space=vmem, size = 0x9000, scoped, tag = 'internal scratch']
  %s0 = inlined_call_operand.vmem [shape: f32[16,256], index: 0, kind: input, shape index: {}]
  %s1 = inlined_call_operand.vmem [shape: f32[16,16], index: 1, kind: input, shape index: {}]
  %s2 = inlined_call_operand.vmem [shape: f32[256,256], index: 2, kind: input, shape index: {}]
  %s3 = inlined_call_operand.vmem [shape: f32[1,256], index: 3, kind: input, shape index: {}]
  %s4 = inlined_call_operand.vmem [shape: f32[24,128], index: 4, kind: input, shape index: {}]
  %s5 = inlined_call_operand.vmem [shape: f32[24,24], index: 5, kind: input, shape index: {}]
  %s6 = inlined_call_operand.vmem [shape: f32[128,256], index: 6, kind: input, shape index: {}]
  %s7 = inlined_call_operand.vmem [shape: f32[1,256], index: 7, kind: input, shape index: {}]
  %s8 = inlined_call_operand.vmem [shape: f32[16,256], index: 8, kind: output, shape index: {0}]
  %s9 = inlined_call_operand.vmem [shape: f32[24,256], index: 9, kind: output, shape index: {1}]
  %10 = xla_tuple %s8, %s9
  %s11 = sld [smem:[#allocation0]]
  $region50: #{gc_node_edge_module.1} parent=0
    _
  %s13 = ssub.s32 1, %s11
  %s14 = scalar_select 0, %s13, %s11
  // Predicated region
  $region2: #{gc_node_edge_module.1} parent=0 // pred_check
    _
  $region3: #{gc_node_edge_module.1} parent=0 // pred_check_branch
    %16 = sbr.rel (0) target = $region5
  $region4: #{gc_node_edge_module.1} parent=0 // pred_region
    _
  $region5: #{gc_node_edge_module.1} parent=0 // pred_fallthru
    _
  // Predicated region
  $region6: #{gc_node_edge_module.1} parent=0 // pred_check
    _
  $region7: #{gc_node_edge_module.1} parent=0 // pred_check_branch
    %18 = sbr.rel (0) target = $region9
  $region8: #{gc_node_edge_module.1} parent=0 // pred_region
    _
  $region9: #{gc_node_edge_module.1} parent=0 // pred_fallthru
    _
  // Predicated region
  $region10: #{gc_node_edge_module.1} parent=0 // pred_check
    _
  $region11: #{gc_node_edge_module.1} parent=0 // pred_check_branch
    %20 = sbr.rel (0) target = $region13
  $region12: #{gc_node_edge_module.1} parent=0 // pred_region
    _
  $region13: #{gc_node_edge_module.1} parent=0 // pred_fallthru
    _
  // Predicated region
  $region14: #{gc_node_edge_module.1} parent=0 // pred_check
    _
  $region15: #{gc_node_edge_module.1} parent=0 // pred_check_branch
    %22 = sbr.rel (0) target = $region17
  $region16: #{gc_node_edge_module.1} parent=0 // pred_region
    _
  $region17: #{gc_node_edge_module.1} parent=0 // pred_fallthru
    _
  // Predicated region
  $region18: #{gc_node_edge_module.1} parent=0 // pred_check
    _
  $region19: #{gc_node_edge_module.1} parent=0 // pred_check_branch
    %24 = sbr.rel (0) target = $region21
  $region20: #{gc_node_edge_module.1} parent=0 // pred_region
    _
  $region21: #{gc_node_edge_module.1} parent=0 // pred_fallthru
    _
  // Predicated region
  $region22: #{gc_node_edge_module.1} parent=0 // pred_check
    _
  $region23: #{gc_node_edge_module.1} parent=0 // pred_check_branch
    %26 = sbr.rel (0) target = $region25
  $region24: #{gc_node_edge_module.1} parent=0 // pred_region
    _
  $region25: #{gc_node_edge_module.1} parent=0 // pred_fallthru
    _
  // Predicated region
  $region26: #{gc_node_edge_module.1} parent=0 // pred_check
    _
  $region27: #{gc_node_edge_module.1} parent=0 // pred_check_branch
    %28 = sbr.rel (0) target = $region29
  $region28: #{gc_node_edge_module.1} parent=0 // pred_region
    _
  $region29: #{gc_node_edge_module.1} parent=0 // pred_fallthru
    _
  // Predicated region
  $region30: #{gc_node_edge_module.1} parent=0 // pred_check
    _
  $region31: #{gc_node_edge_module.1} parent=0 // pred_check_branch
    %30 = sbr.rel (0) target = $region33
  $region32: #{gc_node_edge_module.1} parent=0 // pred_region
    _
  $region33: #{gc_node_edge_module.1} parent=0 // pred_fallthru
    _
  %v31 = vld [vmem:[%s0] sm:$0xff]
  %v32 = vld [vmem:[%s0 + $0x8] sm:$0xff]
  %v33 = vld [vmem:[%s0 + $0x10] sm:$0xff]
  %v34 = vld [vmem:[%s0 + $0x18] sm:$0xff]
  %v35 = vld [vmem:[%s2] sm:$0xff]
  %v36 = vld [vmem:[%s2 + $0x8] sm:$0xff]
  %v37 = vld [vmem:[%s2 + $0x10] sm:$0xff]
  %v38 = vld [vmem:[%s2 + $0x18] sm:$0xff]
  %v39 = vld [vmem:[%s2 + $0x20] sm:$0xff]
  %v40 = vld [vmem:[%s2 + $0x28] sm:$0xff]
  %v41 = vld [vmem:[%s2 + $0x30] sm:$0xff]
  %v42 = vld [vmem:[%s2 + $0x38] sm:$0xff]
  %v43 = vld [vmem:[%s2 + $0x40] sm:$0xff]
  %v44 = vld [vmem:[%s2 + $0x48] sm:$0xff]
  %v45 = vld [vmem:[%s2 + $0x50] sm:$0xff]
  %v46 = vld [vmem:[%s2 + $0x58] sm:$0xff]
  %v47 = vld [vmem:[%s2 + $0x60] sm:$0xff]
  %v48 = vld [vmem:[%s2 + $0x68] sm:$0xff]
  %v49 = vld [vmem:[%s2 + $0x70] sm:$0xff]
  %v50 = vld [vmem:[%s2 + $0x78] sm:$0xff]
  %v51 = vld [vmem:[%s2 + $0x80] sm:$0xff]
  %v52 = vld [vmem:[%s2 + $0x88] sm:$0xff]
  %v53 = vld [vmem:[%s2 + $0x90] sm:$0xff]
  %v54 = vld [vmem:[%s2 + $0x98] sm:$0xff]
  %v55 = vld [vmem:[%s2 + $0xa0] sm:$0xff]
  %v56 = vld [vmem:[%s2 + $0xa8] sm:$0xff]
  %v57 = vld [vmem:[%s2 + $0xb0] sm:$0xff]
  %v58 = vld [vmem:[%s2 + $0xb8] sm:$0xff]
  %v59 = vld [vmem:[%s2 + $0xc0] sm:$0xff]
  %v60 = vld [vmem:[%s2 + $0xc8] sm:$0xff]
  %v61 = vld [vmem:[%s2 + $0xd0] sm:$0xff]
  %v62 = vld [vmem:[%s2 + $0xd8] sm:$0xff]
  %v63 = vld [vmem:[%s2 + $0xe0] sm:$0xff]
  %v64 = vld [vmem:[%s2 + $0xe8] sm:$0xff]
  %v65 = vld [vmem:[%s2 + $0xf0] sm:$0xff]
  %v66 = vld [vmem:[%s2 + $0xf8] sm:$0xff]
  %v67 = vld [vmem:[%s2 + $0x100] sm:$0xff]
  %v68 = vld [vmem:[%s2 + $0x108] sm:$0xff]
  %v69 = vld [vmem:[%s2 + $0x110] sm:$0xff]
  %v70 = vld [vmem:[%s2 + $0x118] sm:$0xff]
  %v71 = vld [vmem:[%s2 + $0x120] sm:$0xff]
  %v72 = vld [vmem:[%s2 + $0x128] sm:$0xff]
  %v73 = vld [vmem:[%s2 + $0x130] sm:$0xff]
  %v74 = vld [vmem:[%s2 + $0x138] sm:$0xff]
  %v75 = vld [vmem:[%s2 + $0x140] sm:$0xff]
  %v76 = vld [vmem:[%s2 + $0x148] sm:$0xff]
  %v77 = vld [vmem:[%s2 + $0x150] sm:$0xff]
  %v78 = vld [vmem:[%s2 + $0x158] sm:$0xff]
  %v79 = vld [vmem:[%s2 + $0x160] sm:$0xff]
  %v80 = vld [vmem:[%s2 + $0x168] sm:$0xff]
  %v81 = vld [vmem:[%s2 + $0x170] sm:$0xff]
  %v82 = vld [vmem:[%s2 + $0x178] sm:$0xff]
  %v83 = vld [vmem:[%s2 + $0x180] sm:$0xff]
  %v84 = vld [vmem:[%s2 + $0x188] sm:$0xff]
  %v85 = vld [vmem:[%s2 + $0x190] sm:$0xff]
  %v86 = vld [vmem:[%s2 + $0x198] sm:$0xff]
  %v87 = vld [vmem:[%s2 + $0x1a0] sm:$0xff]
  %v88 = vld [vmem:[%s2 + $0x1a8] sm:$0xff]
  %v89 = vld [vmem:[%s2 + $0x1b0] sm:$0xff]
  %v90 = vld [vmem:[%s2 + $0x1b8] sm:$0xff]
  %v91 = vld [vmem:[%s2 + $0x1c0] sm:$0xff]
  %v92 = vld [vmem:[%s2 + $0x1c8] sm:$0xff]
  %v93 = vld [vmem:[%s2 + $0x1d0] sm:$0xff]
  %v94 = vld [vmem:[%s2 + $0x1d8] sm:$0xff]
  %v95 = vld [vmem:[%s2 + $0x1e0] sm:$0xff]
  %v96 = vld [vmem:[%s2 + $0x1e8] sm:$0xff]
  %v97 = vld [vmem:[%s2 + $0x1f0] sm:$0xff]
  %v98 = vld [vmem:[%s2 + $0x1f8] sm:$0xff]
  %99 = vmatpush.msra.mxu0 %v65
  %100 = vmatpush.msra.mxu0 %v63
  %101 = vmatpush.msra.mxu0 %v61
  %102 = vmatpush.msra.mxu0 %v59
  %103 = vmatpush.msra.mxu0 %v57
  %104 = vmatpush.msra.mxu0 %v55
  %105 = vmatpush.msra.mxu0 %v53
  %106 = vmatpush.msra.mxu0 %v51
  %107 = vmatpush.msra.mxu0 %v49
  %108 = vmatpush.msra.mxu0 %v47
  %109 = vmatpush.msra.mxu0 %v45
  %110 = vmatpush.msra.mxu0 %v43
  %111 = vmatpush.msra.mxu0 %v41
  %112 = vmatpush.msra.mxu0 %v39
  %113 = vmatpush.msra.mxu0 %v37
  %114 = vmatpush.msra.mxu0 %v35
  %115 = vmatmul.f32.gmra.mxu0 %v31
  %v116 = vpop.f32.mrf.mxu0
  %v117 = vadd.f32 0.0, %v116
  %118 = vmatmul.f32.gmra.mxu0 %v33
  %v119 = vpop.f32.mrf.mxu0
  %v120 = vadd.f32 0.0, %v119
  %121 = vdwg.mxu0
  %122 = vmatpush.msra.mxu0 %v97
  %123 = vmatpush.msra.mxu0 %v95
  %124 = vmatpush.msra.mxu0 %v93
  %125 = vmatpush.msra.mxu0 %v91
  %126 = vmatpush.msra.mxu0 %v89
  %127 = vmatpush.msra.mxu0 %v87
  %128 = vmatpush.msra.mxu0 %v85
  %129 = vmatpush.msra.mxu0 %v83
  %130 = vmatpush.msra.mxu0 %v81
  %131 = vmatpush.msra.mxu0 %v79
  %132 = vmatpush.msra.mxu0 %v77
  %133 = vmatpush.msra.mxu0 %v75
  %134 = vmatpush.msra.mxu0 %v73
  %135 = vmatpush.msra.mxu0 %v71
  %136 = vmatpush.msra.mxu0 %v69
  %137 = vmatpush.msra.mxu0 %v67
  %138 = vmatmul.f32.gmra.mxu0 %v32
  %v139 = vpop.f32.mrf.mxu0
  %v140 = vadd.f32 %v117, %v139
  %141 = vmatmul.f32.gmra.mxu0 %v34
  %v142 = vpop.f32.mrf.mxu0
  %v143 = vadd.f32 %v120, %v142
  %144 = vdwg.mxu0
  %145 = vmatpush.msra.mxu0 %v66
  %146 = vmatpush.msra.mxu0 %v64
  %147 = vmatpush.msra.mxu0 %v62
  %148 = vmatpush.msra.mxu0 %v60
  %149 = vmatpush.msra.mxu0 %v58
  %150 = vmatpush.msra.mxu0 %v56
  %151 = vmatpush.msra.mxu0 %v54
  %152 = vmatpush.msra.mxu0 %v52
  %153 = vmatpush.msra.mxu0 %v50
  %154 = vmatpush.msra.mxu0 %v48
  %155 = vmatpush.msra.mxu0 %v46
  %156 = vmatpush.msra.mxu0 %v44
  %157 = vmatpush.msra.mxu0 %v42
  %158 = vmatpush.msra.mxu0 %v40
  %159 = vmatpush.msra.mxu0 %v38
  %160 = vmatpush.msra.mxu0 %v36
  %161 = vmatmul.f32.gmra.mxu0 %v31
  %v162 = vpop.f32.mrf.mxu0
  %v163 = vadd.f32 0.0, %v162
  %164 = vmatmul.f32.gmra.mxu0 %v33
  %v165 = vpop.f32.mrf.mxu0
  %v166 = vadd.f32 0.0, %v165
  %167 = vdwg.mxu0
  %168 = vmatpush.msra.mxu0 %v98
  %169 = vmatpush.msra.mxu0 %v96
  %170 = vmatpush.msra.mxu0 %v94
  %171 = vmatpush.msra.mxu0 %v92
  %172 = vmatpush.msra.mxu0 %v90
  %173 = vmatpush.msra.mxu0 %v88
  %174 = vmatpush.msra.mxu0 %v86
  %175 = vmatpush.msra.mxu0 %v84
  %176 = vmatpush.msra.mxu0 %v82
  %177 = vmatpush.msra.mxu0 %v80
  %178 = vmatpush.msra.mxu0 %v78
  %179 = vmatpush.msra.mxu0 %v76
  %180 = vmatpush.msra.mxu0 %v74
  %181 = vmatpush.msra.mxu0 %v72
  %182 = vmatpush.msra.mxu0 %v70
  %183 = vmatpush.msra.mxu0 %v68
  %184 = vmatmul.f32.gmra.mxu0 %v32
  %v185 = vpop.f32.mrf.mxu0
  %v186 = vadd.f32 %v163, %v185
  %187 = vmatmul.f32.gmra.mxu0 %v34
  %v188 = vpop.f32.mrf.mxu0
  %v189 = vadd.f32 %v166, %v188
  %190 = vdwg.mxu0
  %v191 = vld [vmem:[%s1] sm:$0xff]
  %v192 = vld [vmem:[%s1 + $0x8] sm:$0xff]
  %v193 = vld [vmem:[%s3] sm:$0x3]
  %v195 = vperm.slane %v193, 0
  %v196 = vperm.slane %v193, 1
  %vm199 = vcmask 130048
  %v201 = vsel %vm199, %v191, 0
  %v204 = vsel %vm199, %v192, 0
  %206 = vmatpush.msra.mxu0 0.0
  %207 = vmatpush.msra.mxu0 0.0
  %208 = vmatpush.msra.mxu0 0.0
  %209 = vmatpush.msra.mxu0 0.0
  %210 = vmatpush.msra.mxu0 0.0
  %211 = vmatpush.msra.mxu0 0.0
  %212 = vmatpush.msra.mxu0 0.0
  %213 = vmatpush.msra.mxu0 0.0
  %214 = vmatpush.msra.mxu0 0.0
  %215 = vmatpush.msra.mxu0 0.0
  %216 = vmatpush.msra.mxu0 0.0
  %217 = vmatpush.msra.mxu0 0.0
  %218 = vmatpush.msra.mxu0 0.0
  %219 = vmatpush.msra.mxu0 0.0
  %220 = vmatpush.msra.mxu0 %v143
  %221 = vmatpush.msra.mxu0 %v140
  %222 = vmatmul.f32.gmra.mxu0 %v201
  %v223 = vpop.f32.mrf.mxu0
  %v224 = vadd.f32 %v195, %v223
  %225 = vmatmul.f32.gmra.mxu0 %v204
  %v226 = vpop.f32.mrf.mxu0
  %v227 = vadd.f32 %v195, %v226
  %228 = vdwg.mxu0
  %229 = vmatpush.msra.mxu0 0.0
  %230 = vmatpush.msra.mxu0 0.0
  %231 = vmatpush.msra.mxu0 0.0
  %232 = vmatpush.msra.mxu0 0.0
  %233 = vmatpush.msra.mxu0 0.0
  %234 = vmatpush.msra.mxu0 0.0
  %235 = vmatpush.msra.mxu0 0.0
  %236 = vmatpush.msra.mxu0 0.0
  %237 = vmatpush.msra.mxu0 0.0
  %238 = vmatpush.msra.mxu0 0.0
  %239 = vmatpush.msra.mxu0 0.0
  %240 = vmatpush.msra.mxu0 0.0
  %241 = vmatpush.msra.mxu0 0.0
  %242 = vmatpush.msra.mxu0 0.0
  %243 = vmatpush.msra.mxu0 %v189
  %244 = vmatpush.msra.mxu0 %v186
  %245 = vmatmul.f32.gmra.mxu0 %v201
  %v246 = vpop.f32.mrf.mxu0
  %v247 = vadd.f32 %v196, %v246
  %248 = vmatmul.f32.gmra.mxu0 %v204
  %v249 = vpop.f32.mrf.mxu0
  %v250 = vadd.f32 %v196, %v249
  %251 = vdwg.mxu0
  %v252 = vmax.f32 %v224, 0.0
  %v253 = vmax.f32 %v247, 0.0
  %v254 = vmax.f32 %v227, 0.0
  %v255 = vmax.f32 %v250, 0.0
  %256 = vst [vmem:[%s8] sm:$0xff] %v252
  %257 = vst [vmem:[%s8 + $0x8] sm:$0xff] %v253
  %258 = vst [vmem:[%s8 + $0x10] sm:$0xff] %v254
  %259 = vst [vmem:[%s8 + $0x18] sm:$0xff] %v255
  %v260 = vld [vmem:[%s4] sm:$0xff]
  %v261 = vld [vmem:[%s4 + $0x8] sm:$0xff]
  %v262 = vld [vmem:[%s4 + $0x10] sm:$0xff]
  %v263 = vmax.f32 %v260, 0.0
  %v264 = vmax.f32 %v261, 0.0
  %v265 = vmax.f32 %v262, 0.0
  %v266 = vld [vmem:[%s6] sm:$0xff]
  %v267 = vld [vmem:[%s6 + $0x8] sm:$0xff]
  %v268 = vld [vmem:[%s6 + $0x10] sm:$0xff]
  %v269 = vld [vmem:[%s6 + $0x18] sm:$0xff]
  %v270 = vld [vmem:[%s6 + $0x20] sm:$0xff]
  %v271 = vld [vmem:[%s6 + $0x28] sm:$0xff]
  %v272 = vld [vmem:[%s6 + $0x30] sm:$0xff]
  %v273 = vld [vmem:[%s6 + $0x38] sm:$0xff]
  %v274 = vld [vmem:[%s6 + $0x40] sm:$0xff]
  %v275 = vld [vmem:[%s6 + $0x48] sm:$0xff]
  %v276 = vld [vmem:[%s6 + $0x50] sm:$0xff]
  %v277 = vld [vmem:[%s6 + $0x58] sm:$0xff]
  %v278 = vld [vmem:[%s6 + $0x60] sm:$0xff]
  %v279 = vld [vmem:[%s6 + $0x68] sm:$0xff]
  %v280 = vld [vmem:[%s6 + $0x70] sm:$0xff]
  %v281 = vld [vmem:[%s6 + $0x78] sm:$0xff]
  %v282 = vld [vmem:[%s6 + $0x80] sm:$0xff]
  %v283 = vld [vmem:[%s6 + $0x88] sm:$0xff]
  %v284 = vld [vmem:[%s6 + $0x90] sm:$0xff]
  %v285 = vld [vmem:[%s6 + $0x98] sm:$0xff]
  %v286 = vld [vmem:[%s6 + $0xa0] sm:$0xff]
  %v287 = vld [vmem:[%s6 + $0xa8] sm:$0xff]
  %v288 = vld [vmem:[%s6 + $0xb0] sm:$0xff]
  %v289 = vld [vmem:[%s6 + $0xb8] sm:$0xff]
  %v290 = vld [vmem:[%s6 + $0xc0] sm:$0xff]
  %v291 = vld [vmem:[%s6 + $0xc8] sm:$0xff]
  %v292 = vld [vmem:[%s6 + $0xd0] sm:$0xff]
  %v293 = vld [vmem:[%s6 + $0xd8] sm:$0xff]
  %v294 = vld [vmem:[%s6 + $0xe0] sm:$0xff]
  %v295 = vld [vmem:[%s6 + $0xe8] sm:$0xff]
  %v296 = vld [vmem:[%s6 + $0xf0] sm:$0xff]
  %v297 = vld [vmem:[%s6 + $0xf8] sm:$0xff]
  %298 = vmatpush.msra.mxu0 %v296
  %299 = vmatpush.msra.mxu0 %v294
  %300 = vmatpush.msra.mxu0 %v292
  %301 = vmatpush.msra.mxu0 %v290
  %302 = vmatpush.msra.mxu0 %v288
  %303 = vmatpush.msra.mxu0 %v286
  %304 = vmatpush.msra.mxu0 %v284
  %305 = vmatpush.msra.mxu0 %v282
  %306 = vmatpush.msra.mxu0 %v280
  %307 = vmatpush.msra.mxu0 %v278
  %308 = vmatpush.msra.mxu0 %v276
  %309 = vmatpush.msra.mxu0 %v274
  %310 = vmatpush.msra.mxu0 %v272
  %311 = vmatpush.msra.mxu0 %v270
  %312 = vmatpush.msra.mxu0 %v268
  %313 = vmatpush.msra.mxu0 %v266
  %314 = vmatmul.f32.gmra.mxu0 %v263
  %v315 = vpop.f32.mrf.mxu0
  %v316 = vadd.f32 0.0, %v315
  %317 = vmatmul.f32.gmra.mxu0 %v264
  %v318 = vpop.f32.mrf.mxu0
  %v319 = vadd.f32 0.0, %v318
  %320 = vmatmul.f32.gmra.mxu0 %v265
  %v321 = vpop.f32.mrf.mxu0
  %v322 = vadd.f32 0.0, %v321
  %323 = vdwg.mxu0
  %324 = vmatpush.msra.mxu0 %v297
  %325 = vmatpush.msra.mxu0 %v295
  %326 = vmatpush.msra.mxu0 %v293
  %327 = vmatpush.msra.mxu0 %v291
  %328 = vmatpush.msra.mxu0 %v289
  %329 = vmatpush.msra.mxu0 %v287
  %330 = vmatpush.msra.mxu0 %v285
  %331 = vmatpush.msra.mxu0 %v283
  %332 = vmatpush.msra.mxu0 %v281
  %333 = vmatpush.msra.mxu0 %v279
  %334 = vmatpush.msra.mxu0 %v277
  %335 = vmatpush.msra.mxu0 %v275
  %336 = vmatpush.msra.mxu0 %v273
  %337 = vmatpush.msra.mxu0 %v271
  %338 = vmatpush.msra.mxu0 %v269
  %339 = vmatpush.msra.mxu0 %v267
  %340 = vmatmul.f32.gmra.mxu0 %v263
  %v341 = vpop.f32.mrf.mxu0
  %v342 = vadd.f32 0.0, %v341
  %343 = vmatmul.f32.gmra.mxu0 %v264
  %v344 = vpop.f32.mrf.mxu0
  %v345 = vadd.f32 0.0, %v344
  %346 = vmatmul.f32.gmra.mxu0 %v265
  %v347 = vpop.f32.mrf.mxu0
  %v348 = vadd.f32 0.0, %v347
  %349 = vdwg.mxu0
  %v350 = vld [vmem:[%s5] sm:$0xff]
  %v351 = vld [vmem:[%s5 + $0x8] sm:$0xff]
  %v352 = vld [vmem:[%s5 + $0x10] sm:$0xff]
  %v353 = vld [vmem:[%s7] sm:$0x3]
  %v355 = vperm.slane %v353, 0
  %v356 = vperm.slane %v353, 1
  %vm359 = vcmask 195584
  %v361 = vsel %vm359, %v350, 0
  %v364 = vsel %vm359, %v351, 0
  %v367 = vsel %vm359, %v352, 0
  %369 = vmatpush.msra.mxu0 0.0
  %370 = vmatpush.msra.mxu0 0.0
  %371 = vmatpush.msra.mxu0 0.0
  %372 = vmatpush.msra.mxu0 0.0
  %373 = vmatpush.msra.mxu0 0.0
  %374 = vmatpush.msra.mxu0 0.0
  %375 = vmatpush.msra.mxu0 0.0
  %376 = vmatpush.msra.mxu0 0.0
  %377 = vmatpush.msra.mxu0 0.0
  %378 = vmatpush.msra.mxu0 0.0
  %379 = vmatpush.msra.mxu0 0.0
  %380 = vmatpush.msra.mxu0 0.0
  %381 = vmatpush.msra.mxu0 0.0
  %382 = vmatpush.msra.mxu0 %v322
  %383 = vmatpush.msra.mxu0 %v319
  %384 = vmatpush.msra.mxu0 %v316
  %385 = vmatmul.f32.gmra.mxu0 %v361
  %v386 = vpop.f32.mrf.mxu0
  %v387 = vadd.f32 %v355, %v386
  %388 = vmatmul.f32.gmra.mxu0 %v364
  %v389 = vpop.f32.mrf.mxu0
  %v390 = vadd.f32 %v355, %v389
  %391 = vmatmul.f32.gmra.mxu0 %v367
  %v392 = vpop.f32.mrf.mxu0
  %v393 = vadd.f32 %v355, %v392
  %394 = vdwg.mxu0
  %395 = vmatpush.msra.mxu0 0.0
  %396 = vmatpush.msra.mxu0 0.0
  %397 = vmatpush.msra.mxu0 0.0
  %398 = vmatpush.msra.mxu0 0.0
  %399 = vmatpush.msra.mxu0 0.0
  %400 = vmatpush.msra.mxu0 0.0
  %401 = vmatpush.msra.mxu0 0.0
  %402 = vmatpush.msra.mxu0 0.0
  %403 = vmatpush.msra.mxu0 0.0
  %404 = vmatpush.msra.mxu0 0.0
  %405 = vmatpush.msra.mxu0 0.0
  %406 = vmatpush.msra.mxu0 0.0
  %407 = vmatpush.msra.mxu0 0.0
  %408 = vmatpush.msra.mxu0 %v348
  %409 = vmatpush.msra.mxu0 %v345
  %410 = vmatpush.msra.mxu0 %v342
  %411 = vmatmul.f32.gmra.mxu0 %v361
  %v412 = vpop.f32.mrf.mxu0
  %v413 = vadd.f32 %v356, %v412
  %414 = vmatmul.f32.gmra.mxu0 %v364
  %v415 = vpop.f32.mrf.mxu0
  %v416 = vadd.f32 %v356, %v415
  %417 = vmatmul.f32.gmra.mxu0 %v367
  %v418 = vpop.f32.mrf.mxu0
  %v419 = vadd.f32 %v356, %v418
  %420 = vdwg.mxu0
  %v421 = vmax.f32 %v387, 0.0
  %v422 = vmax.f32 %v413, 0.0
  %v423 = vmax.f32 %v390, 0.0
  %v424 = vmax.f32 %v416, 0.0
  %v425 = vmax.f32 %v393, 0.0
  %v426 = vmax.f32 %v419, 0.0
  %427 = vst [vmem:[%s9] sm:$0xff] %v421
  %428 = vst [vmem:[%s9 + $0x8] sm:$0xff] %v422
  %429 = vst [vmem:[%s9 + $0x10] sm:$0xff] %v423
  %430 = vst [vmem:[%s9 + $0x18] sm:$0xff] %v424
  %431 = vst [vmem:[%s9 + $0x20] sm:$0xff] %v425
  %432 = vst [vmem:[%s9 + $0x28] sm:$0xff] %v426
  // Predicated region
  $region34: #{gc_node_edge_module.1} parent=0 // pred_check
    _
  $region35: #{gc_node_edge_module.1} parent=0 // pred_check_branch
    %434 = sbr.rel (0) target = $region37
  $region36: #{gc_node_edge_module.1} parent=0 // pred_region
    _
  $region37: #{gc_node_edge_module.1} parent=0 // pred_fallthru
    _
  // Predicated region
  $region38: #{gc_node_edge_module.1} parent=0 // pred_check
    _
  $region39: #{gc_node_edge_module.1} parent=0 // pred_check_branch
    %436 = sbr.rel (0) target = $region41
  $region40: #{gc_node_edge_module.1} parent=0 // pred_region
    _
  $region41: #{gc_node_edge_module.1} parent=0 // pred_fallthru
    _
  // Predicated region
  $region42: #{gc_node_edge_module.1} parent=0 // pred_check
    _
  $region43: #{gc_node_edge_module.1} parent=0 // pred_check_branch
    %438 = sbr.rel (0) target = $region45
  $region44: #{gc_node_edge_module.1} parent=0 // pred_region
    _
  $region45: #{gc_node_edge_module.1} parent=0 // pred_fallthru
    _
  // Predicated region
  $region46: #{gc_node_edge_module.1} parent=0 // pred_check
    _
  $region47: #{gc_node_edge_module.1} parent=0 // pred_check_branch
    %440 = sbr.rel (0) target = $region49
  $region48: #{gc_node_edge_module.1} parent=0 // pred_region
    _
  $region49: #{gc_node_edge_module.1} parent=0 // pred_fallthru
    _

</llo_original>
